<compile_context>
chip_gen: v6e
topology: v6e:2x2x1
jax: 0.10.0
libtpu: 0.0.40
codegen_flags: <defaults>
</compile_context>

<pallas_src>
import functools

import jax
import jax.numpy as jnp
from jax.experimental import pallas as pl
from jax.experimental.pallas import tpu as pltpu


def _round_up(x, m):
    return ((x + m - 1) // m) * m


def _sublane_multiple(dtype):
    """Rows per sublane tile: 8 for f32, 16 for bf16, 32 for int8/fp8."""
    itemsize = jnp.dtype(dtype).itemsize
    return max(8, 32 // max(itemsize, 1))


def _physical_vmem_bytes():
    try:
        return int(pltpu.get_tpu_info().vmem_capacity_bytes)
    except Exception:
        return 64 << 20  # conservative (v7x per-TensorCore)


def _compute_vmem_limit(tm, th, D, in_dtype, out_dtype):
    """Scoped-VMEM limit derived from the actual tile footprint."""
    ib = jnp.dtype(in_dtype).itemsize
    ob = jnp.dtype(out_dtype).itemsize
    x_blk = tm * D * ib
    w12_blk = D * 2 * th * ib
    w3_blk = th * D * ib
    b_blk = (2 * th + D) * ib
    out_blk = tm * D * ob
    acc = tm * D * 4                         # f32 accumulator scratch
    tmps = tm * 2 * th * 4 + tm * th * ib    # h (f32) and g temporaries
    needed = 2 * (x_blk + w12_blk + w3_blk + b_blk + out_blk) + acc + tmps
    needed = int(needed * 1.25) + (2 << 20)  # headroom for internal scratch
    cap = _physical_vmem_bytes()
    return max(min(needed, int(cap * 0.85)), 32 << 20)


def pack_llama_ff_params(params, *, th=512):
    """One-time parameter transform (do this once, outside the forward pass).

    params = (w1, b1, w2, b2, w3, b3) with w1/w2: (D, H), b1/b2: (1, H),
    w3: (H, D), b3: (1, D)  [weights stored (in, out), transposed vs PyTorch].

    Pads H up to a multiple of the H tile and interleaves gate|up weights per
    H tile so that block k of the packed matrix is [w1_tile_k | w2_tile_k].
    """
    w1, b1, w2, b2, w3, b3 = params
    D, H = w1.shape

    th_eff = min(th, _round_up(H, 128))
    th_eff = max((th_eff // 128) * 128, 128)
    H_pad = _round_up(H, th_eff)
    nk = H_pad // th_eff

    if H_pad != H:
        pad_c = ((0, 0), (0, H_pad - H))
        w1 = jnp.pad(w1, pad_c)
        w2 = jnp.pad(w2, pad_c)
        b1 = jnp.pad(b1, pad_c)
        b2 = jnp.pad(b2, pad_c)
        w3 = jnp.pad(w3, ((0, H_pad - H), (0, 0)))

    w12 = jnp.stack(
        [w1.reshape(D, nk, th_eff), w2.reshape(D, nk, th_eff)], axis=2
    ).reshape(D, 2 * H_pad)
    b12 = jnp.stack(
        [b1.reshape(1, nk, th_eff), b2.reshape(1, nk, th_eff)], axis=2
    ).reshape(1, 2 * H_pad)

    return {"w12": w12, "b12": b12, "w3": w3, "b3": b3, "th": th_eff, "nk": nk}


def llama_ff_kernel(x_ref, w12_ref, b12_ref, w3_ref, b3_ref, o_ref, acc_ref, *,
                    th):
    """One (tm, D) row tile x one H tile of the fused SwiGLU FFN."""
    k = pl.program_id(1)

    # Fused gate|up projection: one MXU pass over x, f32 accumulation.
    h = jnp.dot(x_ref[...], w12_ref[...],
                preferred_element_type=jnp.float32) + b12_ref[...]
    h1 = h[:, :th]          # gate half of this H tile
    h2 = h[:, th:]          # up half of this H tile

    # SiLU(h1) * h2 ; cast back to the weight dtype so the down-projection
    # keeps the fast MXU operand path (bf16-in / f32-acc).
    g = (h1 * jax.nn.sigmoid(h1) * h2).astype(w3_ref.dtype)

    partial = jnp.dot(g, w3_ref[...], preferred_element_type=jnp.float32)

    @pl.when(k == 0)
    def _():
        acc_ref[...] = partial            # no zero-init store + RMW

    @pl.when(k > 0)
    def _():
        acc_ref[...] += partial

    @pl.when(k == pl.num_programs(1) - 1)
    def _():
        o_ref[...] = (acc_ref[...] + b3_ref[...]).astype(o_ref.dtype)


def llama_ff(x_2d, packed, *, tm=512, vmem_limit_bytes=None, weight_buffers=2):
    """x_2d: (M, D) activations; packed: output of pack_llama_ff_params.

    tm: row tile.  512 crosses the MXU roofline on v6e/v7x in bf16; on v7x the
        "parallel" M axis also shards across the 2 TensorCores when M yields
        >= 2 tiles.  Shrunk automatically for small M.
    weight_buffers: pipeline depth for the weight streams (3 is worth a few %
        on v5e/v6e when HBM-bound; keep 2 on v7x for VMEM headroom).
    """
    M, D = x_2d.shape
    w12, b12, w3, b3 = packed["w12"], packed["b12"], packed["w3"], packed["b3"]
    th_eff, nk = packed["th"], packed["nk"]

    sub = _sublane_multiple(x_2d.dtype)
    tm_eff = min(_round_up(tm, sub), _round_up(M, sub))

    # Pad rows to a multiple of the row tile (padded rows produce garbage that
    # is discarded by the final out[:M] slice -- do not remove that slice).
    M_pad = _round_up(M, tm_eff)
    if M_pad != M:
        x_2d = jnp.pad(x_2d, ((0, M_pad - M), (0, 0)))

    grid = (M_pad // tm_eff, nk)
    kernel = functools.partial(llama_ff_kernel, th=th_eff)

    if vmem_limit_bytes is None:
        vmem_limit_bytes = _compute_vmem_limit(tm_eff, th_eff, D,
                                               x_2d.dtype, x_2d.dtype)

    def _weight_spec(shape, index_map):
        if weight_buffers != 2:
            return pl.BlockSpec(shape, index_map,
                                pipeline_mode=pl.Buffered(weight_buffers))
        return pl.BlockSpec(shape, index_map)

    out = pl.pallas_call(
        kernel,
        out_shape=jax.ShapeDtypeStruct((M_pad, D), x_2d.dtype),
        grid_spec=pltpu.PrefetchScalarGridSpec(
            num_scalar_prefetch=0,
            grid=grid,
            in_specs=[
                pl.BlockSpec((tm_eff, D), lambda i, k: (i, 0)),         # x rows
                _weight_spec((D, 2 * th_eff), lambda i, k: (0, k)),     # w1|w2
                pl.BlockSpec((1, 2 * th_eff), lambda i, k: (0, k)),     # b1|b2
                _weight_spec((th_eff, D), lambda i, k: (k, 0)),         # w3
                pl.BlockSpec((1, D), lambda i, k: (0, 0)),              # b3
            ],
            out_specs=pl.BlockSpec((tm_eff, D), lambda i, k: (i, 0)),
            scratch_shapes=[pltpu.VMEM((tm_eff, D), jnp.float32)],
        ),
        compiler_params=pltpu.CompilerParams(
            dimension_semantics=("parallel", "arbitrary"),
            vmem_limit_bytes=vmem_limit_bytes,
        ),
    )(x_2d, w12, b12, w3, b3)

    return out[:M]


def llama_ff_module(x, packed, **kw):
    """x: (batch, seq, emb_dim) -> (batch, seq, emb_dim)."""
    B, S, D = x.shape
    out = llama_ff(x.reshape(B * S, D), packed, **kw)
    return out.reshape(B, S, D)


def reference_ff(x, params):
    w1, b1, w2, b2, w3, b3 = params
    h1 = x @ w1 + b1[0]
    h2 = x @ w2 + b2[0]
    g = jax.nn.silu(h1) * h2
    return g @ w3 + b3[0]


if __name__ == "__main__":
    # Small shapes consistent with the module: emb_dim=32, ff_int_dim_mult=4.
    batch, seq, emb_dim, mult = 2, 8, 32, 4
    hidden = emb_dim * mult  # 128

    key = jax.random.PRNGKey(0)
    k = jax.random.split(key, 7)
    x = jax.random.normal(k[0], (batch, seq, emb_dim), dtype=jnp.float32)

    # Deterministic parameter init (PyTorch Linear-style scale, synthetic).
    s_in = 1.0 / jnp.sqrt(emb_dim)
    s_hid = 1.0 / jnp.sqrt(hidden)
    w1 = jax.random.uniform(k[1], (emb_dim, hidden), minval=-s_in, maxval=s_in)
    b1 = jax.random.uniform(k[2], (1, hidden), minval=-s_in, maxval=s_in)
    w2 = jax.random.uniform(k[3], (emb_dim, hidden), minval=-s_in, maxval=s_in)
    b2 = jax.random.uniform(k[4], (1, hidden), minval=-s_in, maxval=s_in)
    w3 = jax.random.uniform(k[5], (hidden, emb_dim), minval=-s_hid, maxval=s_hid)
    b3 = jax.random.uniform(k[6], (1, emb_dim), minval=-s_hid, maxval=s_hid)
    params = (w1, b1, w2, b2, w3, b3)

    # One-time weight repack (hoisted out of the forward pass).
    packed = jax.tree_util.tree_map(
        jax.block_until_ready, pack_llama_ff_params(params, th=512))

    out = llama_ff_module(x, packed)
    out = jax.block_until_ready(out)

    ref = reference_ff(x.reshape(-1, emb_dim), params).reshape(batch, seq, emb_dim)
    assert out.shape == (batch, seq, emb_dim)
    assert jnp.allclose(out, ref, atol=1e-5, rtol=1e-5), "mismatch vs reference"

    print("KERNEL_OK")
</pallas_src>

<mosaic_0001>
module attributes {stable_mosaic.version = 11 : i64} {
  func.func @llama_ff_kernel(%arg0: i32, %arg1: i32, %arg2: memref<16x32xf32, #tpu.memory_space<vmem>>, %arg3: memref<32x256xf32, #tpu.memory_space<vmem>>, %arg4: memref<1x256xf32, #tpu.memory_space<vmem>>, %arg5: memref<128x32xf32, #tpu.memory_space<vmem>>, %arg6: memref<1x32xf32, #tpu.memory_space<vmem>>, %arg7: memref<16x32xf32, #tpu.memory_space<vmem>>, %arg8: memref<16x32xf32, #tpu.memory_space<vmem>>) attributes {dimension_semantics = [#tpu.dimension_semantics<parallel>, #tpu.dimension_semantics<arbitrary>], iteration_bounds = array<i64: 1, 1>, scalar_prefetch = 0 : i64, scratch_operands = 1 : i64, tpu.core_type = #tpu.core_type<tc>, window_params = [{transform_indices = @transform_0, window_bounds = array<i64: 16, 32>}, {transform_indices = @transform_1, window_bounds = array<i64: 32, 256>}, {transform_indices = @transform_2, window_bounds = array<i64: 1, 256>}, {transform_indices = @transform_3, window_bounds = array<i64: 128, 32>}, {pipeline_mode = #tpu.pipeline_mode<synchronous>, transform_indices = @transform_4, window_bounds = array<i64: 1, 32>}, {transform_indices = @transform_5, window_bounds = array<i64: 16, 32>}]} {
    %c0 = arith.constant 0 : index
    %c0_0 = arith.constant 0 : index
    %0 = vector.load %arg2[%c0, %c0_0] : memref<16x32xf32, #tpu.memory_space<vmem>>, vector<16x32xf32>
    %c0_1 = arith.constant 0 : index
    %c0_2 = arith.constant 0 : index
    %1 = vector.load %arg3[%c0_1, %c0_2] : memref<32x256xf32, #tpu.memory_space<vmem>>, vector<32x256xf32>
    %cst = arith.constant dense<0.000000e+00> : vector<16x256xf32>
    %2 = tpu.matmul %0, %1, %cst {dimension_numbers = #tpu.dot_dimension_numbers<[1], [0], [0], [1], [0, 0, 1, 1], [], []>} : vector<16x32xf32>, vector<32x256xf32>, vector<16x256xf32> -> vector<16x256xf32>
    %c0_3 = arith.constant 0 : index
    %c0_4 = arith.constant 0 : index
    %3 = vector.load %arg4[%c0_3, %c0_4] : memref<1x256xf32, #tpu.memory_space<vmem>>, vector<1x256xf32>
    %4 = vector.broadcast %3 : vector<1x256xf32> to vector<16x256xf32>
    %5 = arith.addf %2, %4 : vector<16x256xf32>
    %6 = vector.extract_strided_slice %5 {offsets = [0, 0], sizes = [16, 128], strides = [1, 1]} : vector<16x256xf32> to vector<16x128xf32>
    %7 = vector.extract_strided_slice %5 {offsets = [0, 128], sizes = [16, 128], strides = [1, 1]} : vector<16x256xf32> to vector<16x128xf32>
    %8 = arith.negf %6 : vector<16x128xf32>
    %9 = math.exp %8 : vector<16x128xf32>
    %cst_5 = arith.constant 1.000000e+00 : f32
    %10 = vector.broadcast %cst_5 : f32 to vector<16x128xf32>
    %11 = arith.addf %10, %9 : vector<16x128xf32>
    %12 = arith.divf %10, %11 : vector<16x128xf32>
    %13 = arith.mulf %6, %12 : vector<16x128xf32>
    %14 = arith.mulf %13, %7 : vector<16x128xf32>
    %c0_6 = arith.constant 0 : index
    %c0_7 = arith.constant 0 : index
    %15 = vector.load %arg5[%c0_6, %c0_7] : memref<128x32xf32, #tpu.memory_space<vmem>>, vector<128x32xf32>
    %cst_8 = arith.constant dense<0.000000e+00> : vector<16x32xf32>
    %16 = tpu.matmul %14, %15, %cst_8 {dimension_numbers = #tpu.dot_dimension_numbers<[1], [0], [0], [1], [0, 0, 1, 1], [], []>} : vector<16x128xf32>, vector<128x32xf32>, vector<16x32xf32> -> vector<16x32xf32>
    %c0_i32 = arith.constant 0 : i32
    %17 = arith.cmpi eq, %arg1, %c0_i32 : i32
    %18 = arith.extui %17 : i1 to i32
    %c0_i32_9 = arith.constant 0 : i32
    %19 = arith.cmpi ne, %18, %c0_i32_9 : i32
    scf.if %19 {
      %c0_14 = arith.constant 0 : index
      %c0_15 = arith.constant 0 : index
      %26 = vector.load %arg8[%c0_14, %c0_15] : memref<16x32xf32, #tpu.memory_space<vmem>>, vector<16x32xf32>
      tpu.vector_store %arg8[%c0_14, %c0_15], %16 {strides = array<i32>} : memref<16x32xf32, #tpu.memory_space<vmem>>, vector<16x32xf32>,
    } else {
    }
    %c0_i32_10 = arith.constant 0 : i32
    %20 = arith.cmpi sgt, %arg1, %c0_i32_10 : i32
    %21 = arith.extui %20 : i1 to i32
    %c0_i32_11 = arith.constant 0 : i32
    %22 = arith.cmpi ne, %21, %c0_i32_11 : i32
    scf.if %22 {
      %c0_14 = arith.constant 0 : index
      %c0_15 = arith.constant 0 : index
      %26 = vector.load %arg8[%c0_14, %c0_15] : memref<16x32xf32, #tpu.memory_space<vmem>>, vector<16x32xf32>
      %27 = arith.addf %26, %16 : vector<16x32xf32>
      %c0_16 = arith.constant 0 : index
      %c0_17 = arith.constant 0 : index
      %28 = vector.load %arg8[%c0_16, %c0_17] : memref<16x32xf32, #tpu.memory_space<vmem>>, vector<16x32xf32>
      tpu.vector_store %arg8[%c0_16, %c0_17], %27 {strides = array<i32>} : memref<16x32xf32, #tpu.memory_space<vmem>>, vector<16x32xf32>,
    } else {
    }
    %c0_i32_12 = arith.constant 0 : i32
    %23 = arith.cmpi eq, %arg1, %c0_i32_12 : i32
    %24 = arith.extui %23 : i1 to i32
    %c0_i32_13 = arith.constant 0 : i32
    %25 = arith.cmpi ne, %24, %c0_i32_13 : i32
    scf.if %25 {
      %c0_14 = arith.constant 0 : index
      %c0_15 = arith.constant 0 : index
      %26 = vector.load %arg8[%c0_14, %c0_15] : memref<16x32xf32, #tpu.memory_space<vmem>>, vector<16x32xf32>
      %c0_16 = arith.constant 0 : index
      %c0_17 = arith.constant 0 : index
      %27 = vector.load %arg6[%c0_16, %c0_17] : memref<1x32xf32, #tpu.memory_space<vmem>>, vector<1x32xf32>
      %28 = vector.broadcast %27 : vector<1x32xf32> to vector<16x32xf32>
      %29 = arith.addf %26, %28 : vector<16x32xf32>
      %c0_18 = arith.constant 0 : index
      %c0_19 = arith.constant 0 : index
      %30 = vector.load %arg7[%c0_18, %c0_19] : memref<16x32xf32, #tpu.memory_space<vmem>>, vector<16x32xf32>
      tpu.vector_store %arg7[%c0_18, %c0_19], %29 {strides = array<i32>} : memref<16x32xf32, #tpu.memory_space<vmem>>, vector<16x32xf32>,
    } else {
    }
    return
  }
  func.func @transform_0(%arg0: i32, %arg1: i32) -> (i32, i32) {
    %c0_i32 = arith.constant 0 : i32
    %c0_i32_0 = arith.constant 0 : i32
    return %arg0, %c0_i32 : i32, i32
  }
  func.func @transform_1(%arg0: i32, %arg1: i32) -> (i32, i32) {
    %c0_i32 = arith.constant 0 : i32
    %c0_i32_0 = arith.constant 0 : i32
    return %c0_i32, %arg1 : i32, i32
  }
  func.func @transform_2(%arg0: i32, %arg1: i32) -> (i32, i32) {
    %c0_i32 = arith.constant 0 : i32
    %c0_i32_0 = arith.constant 0 : i32
    return %c0_i32, %arg1 : i32, i32
  }
  func.func @transform_3(%arg0: i32, %arg1: i32) -> (i32, i32) {
    %c0_i32 = arith.constant 0 : i32
    %c0_i32_0 = arith.constant 0 : i32
    return %arg1, %c0_i32 : i32, i32
  }
  func.func @transform_4(%arg0: i32, %arg1: i32) -> (i32, i32) {
    %c0_i32 = arith.constant 0 : i32
    %c0_i32_0 = arith.constant 0 : i32
    %c0_i32_1 = arith.constant 0 : i32
    return %c0_i32, %c0_i32_0 : i32, i32
  }
  func.func @transform_5(%arg0: i32, %arg1: i32) -> (i32, i32) {
    %c0_i32 = arith.constant 0 : i32
    %c0_i32_0 = arith.constant 0 : i32
    return %arg0, %c0_i32 : i32, i32
  }
}

</mosaic_0001>

<llo_original>
// kernel: tpu_custom_call.1
$region0: #{tpu_custom_call.1}
  #allocation0 [shape = 'u32[]', space=smem, size = 0x4, offset = 0x4, fixed_abs, tag = 'smem constant byte address 0x4 - core index']
  #allocation1 [shape = 'u32[144,128]{1,0:T(1,128)}', space=vmem, size = 0x12000, scoped, tag = 'internal scratch']
  #allocation2 [shape = 'f32[16,32]{1,0:T(8,128)}', space=vmem, size = 0x2000, scoped, tag = 'scratch operand']
  %s0 = inlined_call_operand.vmem [shape: f32[16,32], index: 0, kind: input, shape index: {}]
  %s1 = inlined_call_operand.vmem [shape: f32[32,256], index: 1, kind: input, shape index: {}]
  %s2 = inlined_call_operand.vmem [shape: f32[1,256], index: 2, kind: input, shape index: {}]
  %s3 = inlined_call_operand.vmem [shape: f32[128,32], index: 3, kind: input, shape index: {}]
  %s4 = inlined_call_operand.vmem [shape: f32[1,32], index: 4, kind: input, shape index: {}]
  %s5 = inlined_call_operand.hbm [shape: f32[16,32], index: 5, kind: output, shape index: {}]
  %s6 = sld [smem:[#allocation0]]
  $region42: #{tpu_custom_call.1} parent=0
    _
  %s8 = ssub.s32 1, %s6
  %s9 = scalar_select 0, %s8, %s6
  $region1: #{tpu_custom_call.1} parent=0
    #allocation3 [shape = 'u8[8192]{0}', space=vmem, size = 0x2000, scoped, tag = 'output window, operand 0, single buffered']
    #allocation4 [shape = 's32[1]{0}', space=sflag, size = 0x4, scoped, tag = 'scoped memory for tpu_custom_call.1']
    %10 = vsyncpa [#allocation4], 0
    // Predicated region
    $region2: #{tpu_custom_call.1} parent=1 // pred_check
      _
    $region3: #{tpu_custom_call.1} parent=1 // pred_check_branch
      %12 = sbr.rel (0) target = $region5
    $region4: #{tpu_custom_call.1} parent=1 // pred_region
      _
    $region5: #{tpu_custom_call.1} parent=1 // pred_fallthru
      _
    // Predicated region
    $region6: #{tpu_custom_call.1} parent=1 // pred_check
      _
    $region7: #{tpu_custom_call.1} parent=1 // pred_check_branch
      %14 = sbr.rel (0) target = $region9
    $region8: #{tpu_custom_call.1} parent=1 // pred_region
      _
    $region9: #{tpu_custom_call.1} parent=1 // pred_fallthru
      _
    // Predicated region
    $region10: #{tpu_custom_call.1} parent=1 // pred_check
      _
    $region11: #{tpu_custom_call.1} parent=1 // pred_check_branch
      %16 = sbr.rel (0) target = $region13
    $region12: #{tpu_custom_call.1} parent=1 // pred_region
      _
    $region13: #{tpu_custom_call.1} parent=1 // pred_fallthru
      _
    // Predicated region
    $region14: #{tpu_custom_call.1} parent=1 // pred_check
      _
    $region15: #{tpu_custom_call.1} parent=1 // pred_check_branch
      %18 = sbr.rel (0) target = $region17
    $region16: #{tpu_custom_call.1} parent=1 // pred_region
      _
    $region17: #{tpu_custom_call.1} parent=1 // pred_fallthru
      _
    // Predicated region
    $region18: #{tpu_custom_call.1} parent=1 // pred_check
      _
    $region19: #{tpu_custom_call.1} parent=1 // pred_check_branch
      %20 = sbr.rel (0) target = $region21
    $region20: #{tpu_custom_call.1} parent=1 // pred_region
      _
    $region21: #{tpu_custom_call.1} parent=1 // pred_fallthru
      _
    %v21 = vld [vmem:[%s0] sm:$0xff]
    %v22 = vld [vmem:[%s0 + $0x8] sm:$0xff]
    %v23 = vld [vmem:[%s1] sm:$0xff]
    %v24 = vld [vmem:[%s1 + $0x8] sm:$0xff]
    %v25 = vld [vmem:[%s1 + $0x10] sm:$0xff]
    %v26 = vld [vmem:[%s1 + $0x18] sm:$0xff]
    %v27 = vld [vmem:[%s1 + $0x20] sm:$0xff]
    %v28 = vld [vmem:[%s1 + $0x28] sm:$0xff]
    %v29 = vld [vmem:[%s1 + $0x30] sm:$0xff]
    %v30 = vld [vmem:[%s1 + $0x38] sm:$0xff]
    %v31 = vld [vmem:[%s2] sm:$0x3]
    %v33 = vlaneseq
    %v34 = vshrl.u32 %v33, 7
    %v35 = vsub.s32 0, %v34
    %v36 = vrot.slane %v31, %v35
    %v37 = vlaneseq
    %v38 = vshrl.u32 %v37, 7
    %v39 = vsub.s32 1, %v38
    %v40 = vrot.slane %v31, %v39
    %vm43 = vcmask 261120
    %v45 = vsel %vm43, %v21, 0
    %v48 = vsel %vm43, %v22, 0
    %50 = vmatprep.subr.mxu0 0.0
    %51 = vmatpush1.msra.mxu0 0.0
    %52 = vmatprep.subr.mxu0 0.0
    %53 = vmatpush1.msra.mxu0 0.0
    %54 = vmatprep.subr.mxu0 0.0
    %55 = vmatpush1.msra.mxu0 0.0
    %56 = vmatprep.subr.mxu0 0.0
    %57 = vmatpush1.msra.mxu0 0.0
    %58 = vmatprep.subr.mxu0 0.0
    %59 = vmatpush1.msra.mxu0 0.0
    %60 = vmatprep.subr.mxu0 0.0
    %61 = vmatpush1.msra.mxu0 0.0
    %62 = vmatprep.subr.mxu0 0.0
    %63 = vmatpush1.msra.mxu0 0.0
    %64 = vmatprep.subr.mxu0 0.0
    %65 = vmatpush1.msra.mxu0 0.0
    %66 = vmatprep.subr.mxu0 0.0
    %67 = vmatpush1.msra.mxu0 0.0
    %68 = vmatprep.subr.mxu0 0.0
    %69 = vmatpush1.msra.mxu0 0.0
    %70 = vmatprep.subr.mxu0 0.0
    %71 = vmatpush1.msra.mxu0 0.0
    %72 = vmatprep.subr.mxu0 0.0
    %73 = vmatpush1.msra.mxu0 0.0
    %74 = vmatprep.subr.mxu0 %v30
    %75 = vmatpush1.msra.mxu0 %v29
    %76 = vmatprep.subr.mxu0 %v28
    %77 = vmatpush1.msra.mxu0 %v27
    %78 = vmatprep.subr.mxu0 %v26
    %79 = vmatpush1.msra.mxu0 %v25
    %80 = vmatprep.subr.mxu0 %v24
    %81 = vmatpush1.msra.mxu0 %v23
    %82 = vmatprep.subr.mxu0 0.0
    %83 = vmatpush2.msra.mxu0 0.0
    %84 = vmatprep.subr.mxu0 0.0
    %85 = vmatpush2.msra.mxu0 0.0
    %86 = vmatprep.subr.mxu0 0.0
    %87 = vmatpush2.msra.mxu0 0.0
    %88 = vmatprep.subr.mxu0 0.0
    %89 = vmatpush2.msra.mxu0 0.0
    %90 = vmatprep.subr.mxu0 0.0
    %91 = vmatpush2.msra.mxu0 0.0
    %92 = vmatprep.subr.mxu0 0.0
    %93 = vmatpush2.msra.mxu0 0.0
    %94 = vmatprep.subr.mxu0 0.0
    %95 = vmatpush2.msra.mxu0 0.0
    %96 = vmatprep.subr.mxu0 0.0
    %97 = vmatpush2.msra.mxu0 0.0
    %98 = vmatprep.subr.mxu0 0.0
    %99 = vmatpush2.msra.mxu0 0.0
    %100 = vmatprep.subr.mxu0 0.0
    %101 = vmatpush2.msra.mxu0 0.0
    %102 = vmatprep.subr.mxu0 0.0
    %103 = vmatpush2.msra.mxu0 0.0
    %104 = vmatprep.subr.mxu0 0.0
    %105 = vmatpush2.msra.mxu0 0.0
    %106 = vmatprep.subr.mxu0 0.0
    %107 = vmatpush2.msra.mxu0 0.0
    %108 = vmatprep.subr.mxu0 0.0
    %109 = vmatpush2.msra.mxu0 0.0
    %110 = vmatprep.subr.mxu0 0.0
    %111 = vmatpush2.msra.mxu0 0.0
    %112 = vmatprep.subr.mxu0 0.0
    %113 = vmatpush2.msra.mxu0 0.0
    %114 = vmatprep.mubr.f32.mxu0 0.0
    %115 = vmatmul.mubr.f32.gmra.mxu0 %v45
    %v116 = vpop.f32.mrf.mxu0
    %v117 = vadd.f32 %v36, %v116
    %v118 = vpop.f32.mrf.mxu0
    %v119 = vadd.f32 %v40, %v118
    %120 = vmatprep.mubr.f32.mxu0 0.0
    %121 = vmatmul.mubr.f32.gmra.mxu0 %v48
    %v122 = vpop.f32.mrf.mxu0
    %v123 = vadd.f32 %v36, %v122
    %v124 = vpop.f32.mrf.mxu0
    %v125 = vadd.f32 %v40, %v124
    %126 = vdwg.mxu0
    %v127 = vxor.u32 %v117, 2147483648
    %v128 = vxor.u32 %v123, 2147483648
    %v129 = vmul.f32 %v127, 1.442695
    %v130 = vpow.pop %v129
    %v131 = vmul.f32 %v128, 1.442695
    %v132 = vpow.pop %v131
    %v133 = vadd.f32 %v130, 1.0
    %v134 = vadd.f32 %v132, 1.0
    %v135 = vrcp.pop %v133
    %v136 = vmul.f32 1.0, %v135
    %v137 = vrcp.pop %v134
    %v138 = vmul.f32 1.0, %v137
    %v139 = vmul.f32 %v117, %v136
    %v140 = vmul.f32 %v123, %v138
    %v141 = vmul.f32 %v139, %v119
    %v142 = vmul.f32 %v140, %v125
    %v143 = vld [vmem:[%s3] sm:$0xff]
    %v144 = vld [vmem:[%s3 + $0x8] sm:$0xff]
    %v145 = vld [vmem:[%s3 + $0x10] sm:$0xff]
    %v146 = vld [vmem:[%s3 + $0x18] sm:$0xff]
    %v147 = vld [vmem:[%s3 + $0x20] sm:$0xff]
    %v148 = vld [vmem:[%s3 + $0x28] sm:$0xff]
    %v149 = vld [vmem:[%s3 + $0x30] sm:$0xff]
    %v150 = vld [vmem:[%s3 + $0x38] sm:$0xff]
    %v151 = vld [vmem:[%s3 + $0x40] sm:$0xff]
    %v152 = vld [vmem:[%s3 + $0x48] sm:$0xff]
    %v153 = vld [vmem:[%s3 + $0x50] sm:$0xff]
    %v154 = vld [vmem:[%s3 + $0x58] sm:$0xff]
    %v155 = vld [vmem:[%s3 + $0x60] sm:$0xff]
    %v156 = vld [vmem:[%s3 + $0x68] sm:$0xff]
    %v157 = vld [vmem:[%s3 + $0x70] sm:$0xff]
    %v158 = vld [vmem:[%s3 + $0x78] sm:$0xff]
    %159 = vmatprep.subr.mxu0 0.0
    %160 = vmatpush1.msra.mxu0 %v158
    %161 = vmatprep.subr.mxu0 0.0
    %162 = vmatpush1.msra.mxu0 %v157
    %163 = vmatprep.subr.mxu0 0.0
    %164 = vmatpush1.msra.mxu0 %v156
    %165 = vmatprep.subr.mxu0 0.0
    %166 = vmatpush1.msra.mxu0 %v155
    %167 = vmatprep.subr.mxu0 0.0
    %168 = vmatpush1.msra.mxu0 %v154
    %169 = vmatprep.subr.mxu0 0.0
    %170 = vmatpush1.msra.mxu0 %v153
    %171 = vmatprep.subr.mxu0 0.0
    %172 = vmatpush1.msra.mxu0 %v152
    %173 = vmatprep.subr.mxu0 0.0
    %174 = vmatpush1.msra.mxu0 %v151
    %175 = vmatprep.subr.mxu0 0.0
    %176 = vmatpush1.msra.mxu0 %v150
    %177 = vmatprep.subr.mxu0 0.0
    %178 = vmatpush1.msra.mxu0 %v149
    %179 = vmatprep.subr.mxu0 0.0
    %180 = vmatpush1.msra.mxu0 %v148
    %181 = vmatprep.subr.mxu0 0.0
    %182 = vmatpush1.msra.mxu0 %v147
    %183 = vmatprep.subr.mxu0 0.0
    %184 = vmatpush1.msra.mxu0 %v146
    %185 = vmatprep.subr.mxu0 0.0
    %186 = vmatpush1.msra.mxu0 %v145
    %187 = vmatprep.subr.mxu0 0.0
    %188 = vmatpush1.msra.mxu0 %v144
    %189 = vmatprep.subr.mxu0 0.0
    %190 = vmatpush1.msra.mxu0 %v143
    %191 = vmatprep.subr.mxu0 0.0
    %192 = vmatpush2.msra.mxu0 0.0
    %193 = vmatprep.subr.mxu0 0.0
    %194 = vmatpush2.msra.mxu0 0.0
    %195 = vmatprep.subr.mxu0 0.0
    %196 = vmatpush2.msra.mxu0 0.0
    %197 = vmatprep.subr.mxu0 0.0
    %198 = vmatpush2.msra.mxu0 0.0
    %199 = vmatprep.subr.mxu0 0.0
    %200 = vmatpush2.msra.mxu0 0.0
    %201 = vmatprep.subr.mxu0 0.0
    %202 = vmatpush2.msra.mxu0 0.0
    %203 = vmatprep.subr.mxu0 0.0
    %204 = vmatpush2.msra.mxu0 0.0
    %205 = vmatprep.subr.mxu0 0.0
    %206 = vmatpush2.msra.mxu0 0.0
    %207 = vmatprep.subr.mxu0 0.0
    %208 = vmatpush2.msra.mxu0 0.0
    %209 = vmatprep.subr.mxu0 0.0
    %210 = vmatpush2.msra.mxu0 0.0
    %211 = vmatprep.subr.mxu0 0.0
    %212 = vmatpush2.msra.mxu0 0.0
    %213 = vmatprep.subr.mxu0 0.0
    %214 = vmatpush2.msra.mxu0 0.0
    %215 = vmatprep.subr.mxu0 0.0
    %216 = vmatpush2.msra.mxu0 0.0
    %217 = vmatprep.subr.mxu0 0.0
    %218 = vmatpush2.msra.mxu0 0.0
    %219 = vmatprep.subr.mxu0 0.0
    %220 = vmatpush2.msra.mxu0 0.0
    %221 = vmatprep.subr.mxu0 0.0
    %222 = vmatpush2.msra.mxu0 0.0
    %223 = vmatprep.mubr.f32.mxu0 0.0
    %224 = vmatmul.mubr.f32.gmra.mxu0 %v141
    %v225 = vpop.f32.mrf.mxu0
    %v226 = vadd.f32 0.0, %v225
    %v227 = vpop.f32.mrf.mxu0
    %228 = vmatprep.mubr.f32.mxu0 0.0
    %229 = vmatmul.mubr.f32.gmra.mxu0 %v142
    %v230 = vpop.f32.mrf.mxu0
    %v231 = vadd.f32 0.0, %v230
    %v232 = vpop.f32.mrf.mxu0
    %233 = vdwg.mxu0
    %p234 = scmp.eq.s32.totalorder 0, 0
    // Predicated region
    $region22: #{tpu_custom_call.1} parent=1 // pred_check
      %p235 = pneg %p234
    $region23: #{tpu_custom_call.1} parent=1 // pred_check_branch
      %237 = sbr.rel (%p235) target = $region25
    $region24: #{tpu_custom_call.1} parent=1 // pred_region
      %238 = vst.msk [vmem:[#allocation2] sm:$0xff] %vm43, %v226
      %239 = vst.msk [vmem:[#allocation2 + $0x8] sm:$0xff] %vm43, %v231
    $region25: #{tpu_custom_call.1} parent=1 // pred_fallthru
      _
    %p240 = scmp.gt.s32.totalorder 0, 0
    // Predicated region
    $region26: #{tpu_custom_call.1} parent=1 // pred_check
      %p241 = pneg %p240
    $region27: #{tpu_custom_call.1} parent=1 // pred_check_branch
      %243 = sbr.rel (%p241) target = $region29
    $region28: #{tpu_custom_call.1} parent=1 // pred_region
      %v244 = vld [vmem:[#allocation2] sm:$0xff]
      %v245 = vld [vmem:[#allocation2 + $0x8] sm:$0xff]
      %v246 = vadd.f32 %v244, %v226
      %v247 = vadd.f32 %v245, %v231
      %248 = vst.msk [vmem:[#allocation2] sm:$0xff] %vm43, %v246
      %249 = vst.msk [vmem:[#allocation2 + $0x8] sm:$0xff] %vm43, %v247
    $region29: #{tpu_custom_call.1} parent=1 // pred_fallthru
      _
    // Predicated region
    $region30: #{tpu_custom_call.1} parent=1 // pred_check
      %p250 = pneg %p234
    $region31: #{tpu_custom_call.1} parent=1 // pred_check_branch
      %252 = sbr.rel (%p250) target = $region33
    $region32: #{tpu_custom_call.1} parent=1 // pred_region
      %v253 = vld [vmem:[#allocation2] sm:$0xff]
      %v254 = vld [vmem:[#allocation2 + $0x8] sm:$0xff]
      %v255 = vld [vmem:[%s4] sm:$0x1]
      %v257 = vlaneseq
      %v258 = vshrl.u32 %v257, 7
      %v259 = vsub.s32 0, %v258
      %v260 = vrot.slane %v255, %v259
      %v262 = vadd.f32 %v253, %v260
      %v263 = vadd.f32 %v254, %v260
      %264 = vst.msk [vmem:[#allocation3] sm:$0xff] %vm43, %v262
      %265 = vst.msk [vmem:[#allocation3 + $0x8] sm:$0xff] %vm43, %v263
    $region33: #{tpu_custom_call.1} parent=1 // pred_fallthru
      _
    // Predicated region
    $region34: #{tpu_custom_call.1} parent=1 // pred_check
      _
    $region35: #{tpu_custom_call.1} parent=1 // pred_check_branch
      %267 = sbr.rel (0) target = $region37
    $region36: #{tpu_custom_call.1} parent=1 // pred_region
      %s269 = ssub.s32 256, 256
      %270 = vsyncadd [#allocation4], %s269
      %s271 = sshll.u32 [#allocation3], 4
      %s272 = int_to_ptr.vmem [resolvable:$true] %s271
      %277 = dma.vmem_to_hbm [thread:$0]  %s272, 256, %s5, [#allocation4], 128, 128, 8
    $region37: #{tpu_custom_call.1} parent=1 // pred_fallthru
      _
    // Predicated region
    $region38: #{tpu_custom_call.1} parent=1 // pred_check
      _
    $region39: #{tpu_custom_call.1} parent=1 // pred_check_branch
      %279 = sbr.rel (0) target = $region41
    $region40: #{tpu_custom_call.1} parent=1 // pred_region
      %280 = dma.done [#allocation4], 256
    $region41: #{tpu_custom_call.1} parent=1 // pred_fallthru
      _
    %281 = vsyncpa [#allocation4], 1

</llo_original>
